<compile_context>
chip_gen: v5e
topology: v5e:2x2
jax: 0.10.0
libtpu: 0.0.40
codegen_flags: <defaults>
</compile_context>

<pallas_src>
import functools

import jax
import jax.numpy as jnp
from jax.experimental import pallas as pl
from jax.experimental.pallas import tpu as pltpu


def _round_up(x, m):
    return ((x + m - 1) // m) * m


# ----------------------------- Pallas kernels --------------------------------
def _freqs_kernel(inv_freq_ref, freqs_ref, *, tile_rows):
    # inv_freq_ref: (1, dim) f32  (already duplicated: concat(inv_freq, inv_freq))
    # freqs_ref:    (tile_rows, dim) f32 output tile
    row0 = pl.program_id(0) * tile_rows
    t = (jax.lax.broadcasted_iota(jnp.int32, freqs_ref.shape, 0) + row0).astype(
        jnp.float32
    )
    freqs_ref[...] = t * inv_freq_ref[...]


def _freqs_xpos_kernel(
    inv_freq_ref, scale_ref, freqs_ref, scale_out_ref, *, tile_rows, half_seq,
    inv_scale_base,
):
    row0 = pl.program_id(0) * tile_rows
    t = (jax.lax.broadcasted_iota(jnp.int32, freqs_ref.shape, 0) + row0).astype(
        jnp.float32
    )
    freqs_ref[...] = t * inv_freq_ref[...]
    power = (t - half_seq) * inv_scale_base
    # scale ** power == exp(power * log(scale)); scale entries are all > 0.
    scale_out_ref[...] = jnp.exp(power * jnp.log(scale_ref[...]))


# ----------------------------- wrapper ----------------------------------------
def rotary_embedding(seq_len, dim, *, use_xpos=False, scale_base=512):
    """Pallas implementation of RotaryEmbedding(dim, use_xpos).forward(seq_len).

    Returns (freqs, scale): freqs is (seq_len, dim) f32; scale is the python
    float 1.0 when use_xpos=False, else a (seq_len, dim) f32 array.
    """
    inv_freq = 1.0 / (10000.0 ** (jnp.arange(0, dim, 2, dtype=jnp.float32) / dim))
    inv_freq_full = jnp.concatenate([inv_freq, inv_freq])[None, :]  # (1, dim)

    # Sequence tiling: 512 rows/block amortizes the ~0.35us per-grid-step cost
    # while keeping double-buffered output blocks tiny (512*dim*4B each), well
    # inside default scoped VMEM on all generations (v5e/v6e/v7x).
    tile_rows = min(512, _round_up(seq_len, 8))
    padded_seq = _round_up(seq_len, tile_rows)
    grid = (padded_seq // tile_rows,)

    vec_spec = pl.BlockSpec((1, dim), lambda i: (0, 0))
    out_spec = pl.BlockSpec((tile_rows, dim), lambda i: (i, 0))
    cparams = pltpu.CompilerParams(dimension_semantics=("parallel",))

    if not use_xpos:
        freqs = pl.pallas_call(
            functools.partial(_freqs_kernel, tile_rows=tile_rows),
            out_shape=jax.ShapeDtypeStruct((padded_seq, dim), jnp.float32),
            grid_spec=pltpu.PrefetchScalarGridSpec(
                num_scalar_prefetch=0,
                grid=grid,
                in_specs=[vec_spec],
                out_specs=out_spec,
            ),
            compiler_params=cparams,
        )(inv_freq_full)
        return freqs[:seq_len], 1.0

    scale = (jnp.arange(0, dim, 2, dtype=jnp.float32) + 0.4 * dim) / (1.4 * dim)
    scale_full = jnp.concatenate([scale, scale])[None, :]  # (1, dim)
    freqs, scale_out = pl.pallas_call(
        functools.partial(
            _freqs_xpos_kernel,
            tile_rows=tile_rows,
            half_seq=float(seq_len // 2),
            inv_scale_base=1.0 / float(scale_base),
        ),
        out_shape=(
            jax.ShapeDtypeStruct((padded_seq, dim), jnp.float32),
            jax.ShapeDtypeStruct((padded_seq, dim), jnp.float32),
        ),
        grid_spec=pltpu.PrefetchScalarGridSpec(
            num_scalar_prefetch=0,
            grid=grid,
            in_specs=[vec_spec, vec_spec],
            out_specs=(out_spec, out_spec),
        ),
        compiler_params=cparams,
    )(inv_freq_full, scale_full)
    return freqs[:seq_len], scale_out[:seq_len]


# ----------------------------- pure-JAX reference -----------------------------
def rotary_reference(seq_len, dim, *, use_xpos=False, scale_base=512):
    t = jnp.arange(seq_len, dtype=jnp.float32)
    inv_freq = 1.0 / (10000.0 ** (jnp.arange(0, dim, 2, dtype=jnp.float32) / dim))
    freqs = jnp.einsum("i,j->ij", t, inv_freq)
    freqs = jnp.concatenate([freqs, freqs], axis=-1)
    if not use_xpos:
        return freqs, 1.0
    scale = (jnp.arange(0, dim, 2, dtype=jnp.float32) + 0.4 * dim) / (1.4 * dim)
    power = (jnp.arange(seq_len, dtype=jnp.float32) - seq_len // 2) / scale_base
    scale = scale[None, :] ** power[:, None]
    scale = jnp.concatenate([scale, scale], axis=-1)
    return freqs, scale


if __name__ == "__main__":
    # RotaryEmbedding.forward takes only (seq_len, device) -- it has no tensor
    # inputs. The PRNG key is created per the harness contract but unused.
    _ = jax.random.PRNGKey(0)

    # Small shapes consistent with the module.
    seq_len, dim = 8, 32

    # use_xpos = False branch: (freqs, 1.0)
    freqs, scale1 = rotary_embedding(seq_len, dim, use_xpos=False)
    freqs = jax.block_until_ready(freqs)
    ref_freqs, ref_scale1 = rotary_reference(seq_len, dim, use_xpos=False)
    assert freqs.shape == (seq_len, dim) and freqs.dtype == jnp.float32
    assert scale1 == 1.0 and ref_scale1 == 1.0
    assert jnp.allclose(freqs, ref_freqs, atol=1e-5, rtol=1e-5), "freqs mismatch"

    # use_xpos = True branch: (freqs, scale)
    freqs_x, scale_x = rotary_embedding(seq_len, dim, use_xpos=True, scale_base=512)
    jax.block_until_ready((freqs_x, scale_x))
    ref_freqs_x, ref_scale_x = rotary_reference(
        seq_len, dim, use_xpos=True, scale_base=512
    )
    assert jnp.allclose(freqs_x, ref_freqs_x, atol=1e-5, rtol=1e-5), "xpos freqs mismatch"
    assert jnp.allclose(scale_x, ref_scale_x, atol=1e-5, rtol=1e-5), "xpos scale mismatch"

    # Larger, non-tile-multiple sequence exercises the tiled / padded path.
    seq_len2, dim2 = 1040, 64
    freqs2, scale2 = rotary_embedding(seq_len2, dim2, use_xpos=True, scale_base=512)
    jax.block_until_ready((freqs2, scale2))
    ref_freqs2, ref_scale2 = rotary_reference(
        seq_len2, dim2, use_xpos=True, scale_base=512
    )
    assert freqs2.shape == (seq_len2, dim2)
    assert jnp.allclose(freqs2, ref_freqs2, atol=1e-4, rtol=1e-5), "tiled freqs mismatch"
    assert jnp.allclose(scale2, ref_scale2, atol=1e-5, rtol=1e-5), "tiled scale mismatch"

    print("KERNEL_OK")
</pallas_src>

<mosaic_0001>
module attributes {stable_mosaic.version = 11 : i64} {
  func.func @_freqs_kernel(%arg0: i32, %arg1: memref<1x32xf32, #tpu.memory_space<vmem>>, %arg2: memref<8x32xf32, #tpu.memory_space<vmem>>) attributes {dimension_semantics = [#tpu.dimension_semantics<parallel>], iteration_bounds = array<i64: 1>, scalar_prefetch = 0 : i64, scratch_operands = 0 : i64, tpu.core_type = #tpu.core_type<tc>, window_params = [{pipeline_mode = #tpu.pipeline_mode<synchronous>, transform_indices = @transform_0, window_bounds = array<i64: 1, 32>}, {transform_indices = @transform_1, window_bounds = array<i64: 8, 32>}]} {
    %c8_i32 = arith.constant 8 : i32
    %0 = arith.muli %arg0, %c8_i32 : i32
    %1 = tpu.iota {dimensions = array<i32: 0>} : vector<8x32xi32>
    %2 = vector.broadcast %0 : i32 to vector<8x32xi32>
    %3 = arith.addi %1, %2 : vector<8x32xi32>
    %4 = arith.sitofp %3 : vector<8x32xi32> to vector<8x32xf32>
    %c0 = arith.constant 0 : index
    %c0_0 = arith.constant 0 : index
    %5 = vector.load %arg1[%c0, %c0_0] : memref<1x32xf32, #tpu.memory_space<vmem>>, vector<1x32xf32>
    %6 = vector.broadcast %5 : vector<1x32xf32> to vector<8x32xf32>
    %7 = arith.mulf %4, %6 : vector<8x32xf32>
    %c0_1 = arith.constant 0 : index
    %c0_2 = arith.constant 0 : index
    %8 = vector.load %arg2[%c0_1, %c0_2] : memref<8x32xf32, #tpu.memory_space<vmem>>, vector<8x32xf32>
    tpu.vector_store %arg2[%c0_1, %c0_2], %7 {strides = array<i32>} : memref<8x32xf32, #tpu.memory_space<vmem>>, vector<8x32xf32>,
    return
  }
  func.func @transform_0(%arg0: i32) -> (i32, i32) {
    %c0_i32 = arith.constant 0 : i32
    %c0_i32_0 = arith.constant 0 : i32
    %c0_i32_1 = arith.constant 0 : i32
    return %c0_i32, %c0_i32_0 : i32, i32
  }
  func.func @transform_1(%arg0: i32) -> (i32, i32) {
    %c0_i32 = arith.constant 0 : i32
    %c0_i32_0 = arith.constant 0 : i32
    return %arg0, %c0_i32 : i32, i32
  }
}

</mosaic_0001>

<llo_original>
// kernel: tpu_custom_call.1
$region0: #{tpu_custom_call.1}
  #allocation0 [shape = 'u32[]', space=smem, size = 0x4, offset = 0x4, fixed_abs, tag = 'smem constant byte address 0x4 - core index']
  #allocation1 [shape = 'u32[72,128]{1,0:T(1,128)}', space=vmem, size = 0x9000, scoped, tag = 'internal scratch']
  %s0 = inlined_call_operand.hbm [shape: f32[1,32], index: 0, kind: input, shape index: {}]
  %s1 = inlined_call_operand.hbm [shape: f32[8,32], index: 1, kind: output, shape index: {}]
  %s2 = sld [smem:[#allocation0]]
  $region18: #{tpu_custom_call.1} parent=0
    _
  %s4 = ssub.s32 1, %s2
  %s5 = scalar_select 0, %s4, %s2
  $region1: #{tpu_custom_call.1} parent=0
    #allocation2 [shape = 'u8[512]{0}', space=vmem, size = 0x400, scoped, tag = 'input window, operand 0, single buffered']
    #allocation3 [shape = 's32[1]{0}', space=sflag, size = 0x4, scoped, tag = 'scoped memory for tpu_custom_call.1']
    #allocation4 [shape = 's32[1]{0}', space=sflag, size = 0x4, scoped, tag = 'scoped memory for tpu_custom_call.1']
    #allocation5 [shape = 'u8[4096]{0}', space=vmem, size = 0x1000, scoped, tag = 'output window, operand 0, single buffered']
    %6 = vsyncpa [#allocation3], 0
    %7 = vsyncpa [#allocation4], 0
    // Predicated region
    $region2: #{tpu_custom_call.1} parent=1 // pred_check
      _
    $region3: #{tpu_custom_call.1} parent=1 // pred_check_branch
      %9 = sbr.rel (0) target = $region5
    $region4: #{tpu_custom_call.1} parent=1 // pred_region
      %11 = vsyncadd [#allocation3], 0
      %s13 = sshll.u32 %s0, 4
      %s14 = int_to_ptr.hbm [resolvable:$true] %s13
      %s15 = sshll.u32 [#allocation2], 4
      %s16 = int_to_ptr.vmem [resolvable:$true] %s15
      %18 = dma.hbm_to_vmem [thread:$0]  %s14, 16, %s16, [#allocation3]
    $region5: #{tpu_custom_call.1} parent=1 // pred_fallthru
      _
    // Predicated region
    $region6: #{tpu_custom_call.1} parent=1 // pred_check
      _
    $region7: #{tpu_custom_call.1} parent=1 // pred_check_branch
      %20 = sbr.rel (0) target = $region9
    $region8: #{tpu_custom_call.1} parent=1 // pred_region
      %22 = dma.done [#allocation3], 16
    $region9: #{tpu_custom_call.1} parent=1 // pred_fallthru
      _
    %s23 = smul.u32 0, 8
    %v24 = vlaneseq
    %v25 = vshrl.u32 %v24, 7
    %v26 = vstv %s23
    %v27 = vadd.s32 %v25, %v26
    %v28 = vcvt.s32.f32 %v27
    %v29 = vld [vmem:[#allocation2] sm:$0x1]
    %v31 = vperm.slane %v29, 0
    %v33 = vmul.f32 %v28, %v31
    %vm34 = vcmask 261120
    %35 = vst.msk [vmem:[#allocation5] sm:$0xff] %vm34, %v33
    // Predicated region
    $region10: #{tpu_custom_call.1} parent=1 // pred_check
      _
    $region11: #{tpu_custom_call.1} parent=1 // pred_check_branch
      %37 = sbr.rel (0) target = $region13
    $region12: #{tpu_custom_call.1} parent=1 // pred_region
      %39 = vsyncadd [#allocation4], 0
      %s41 = sshll.u32 [#allocation5], 4
      %s42 = int_to_ptr.vmem [resolvable:$true] %s41
      %s43 = sshll.u32 %s1, 4
      %s44 = int_to_ptr.hbm [resolvable:$true] %s43
      %46 = dma.vmem_to_hbm [thread:$0]  %s42, 128, %s44, [#allocation4]
    $region13: #{tpu_custom_call.1} parent=1 // pred_fallthru
      _
    // Predicated region
    $region14: #{tpu_custom_call.1} parent=1 // pred_check
      _
    $region15: #{tpu_custom_call.1} parent=1 // pred_check_branch
      %48 = sbr.rel (0) target = $region17
    $region16: #{tpu_custom_call.1} parent=1 // pred_region
      %50 = dma.done [#allocation4], 128
    $region17: #{tpu_custom_call.1} parent=1 // pred_fallthru
      _
    %51 = vsyncpa [#allocation3], 1
    %52 = vsyncpa [#allocation4], 1

</llo_original>
